<compile_context>
chip_gen: v6e
topology: v6e:2x2x1
jax: 0.10.0
libtpu: 0.0.40
codegen_flags: <defaults>
</compile_context>

<pallas_src>
import functools

import jax
import jax.numpy as jnp
from jax.experimental import pallas as pl
from jax.experimental.pallas import tpu as pltpu


def _mask2d_kernel(x_ref, s_ref, out_ref, *, value, append):
    # x_ref:   (tile_b, C, R, L)
    # s_ref:   (tile_b, R, L)       (native mask dtype; cast here, not in wrapper)
    # out_ref: (tile_b, C_out, R, L)
    x = x_ref[...]
    s = s_ref[...].astype(x.dtype)
    s_b = s[:, None, :, :]                         # broadcast over channel axis
    masked = x * s_b + value * (1 - s_b)
    if append:
        # Single full-block (unmasked) store: assemble the whole slab in registers.
        full = jnp.concatenate([masked, s_b], axis=1)
        out_ref[...] = full.astype(out_ref.dtype)
    else:
        out_ref[...] = masked.astype(out_ref.dtype)


def _padded_slab_bytes(channels, rows, lanes, dtype):
    """VMEM bytes of a (channels, rows, lanes) slab after (sublane, 128) padding."""
    d = jnp.dtype(dtype)
    sub = max(1, 32 // d.itemsize)                 # 8 f32, 16 bf16, 32 int8
    r_pad = -(-rows // sub) * sub
    l_pad = -(-lanes // 128) * 128
    return channels * r_pad * l_pad * d.itemsize


def _default_tile_budget_bytes():
    # ~24 MiB per-core tile budget on 64 MiB/TC chips (v7x), ~40 MiB on
    # 128 MiB chips (v5e/v6e).  Best-effort hardware query with a safe fallback.
    vmem = 64 << 20
    try:
        info_fn = getattr(pltpu, "get_tpu_info", None)
        if info_fn is not None:
            vmem = int(info_fn().vmem_capacity_bytes)
    except Exception:
        pass
    return (40 << 20) if vmem >= (96 << 20) else (24 << 20)


def mask_layer_2d(x, S, *, value=0.0, append=True, vmem_tile_budget_bytes=None):
    """Pallas implementation of MaskLayer2d.forward((x, S)).

    x: (B, C, H, W); S: (B, H, W) or (B, 1, H, W) mask.
    Returns (B, C+1, H, W) if append else (B, C, H, W), dtype of x.
    """
    if S.ndim == 3:
        S = S[:, None, :, :]
    assert x.ndim == 4 and S.ndim == 4 and S.shape[1] == 1
    assert S.shape[0] == x.shape[0] and S.shape[2:] == x.shape[2:]

    B, C, H, W = x.shape
    HW = H * W
    C_out = C + 1 if append else C

    # Keep the mask in its native dtype (cast in-kernel); bool -> int8 for DMA.
    if S.dtype == jnp.bool_:
        S = S.astype(jnp.int8)
    s_dtype = S.dtype

    # Lane/sublane-dense spatial layout: fold H*W onto (R, 128) when possible so
    # the last-two block dims are dense; otherwise fall back to (1, HW).
    if HW % 128 == 0:
        R, L = HW // 128, 128
    else:
        R, L = 1, HW
    x4 = x.reshape(B, C, R, L)          # free: contiguous row-major reshape
    s4 = S.reshape(B, R, L)

    # --- tile-size selection from a padded, double-buffered VMEM footprint ----
    if vmem_tile_budget_bytes is None:
        vmem_tile_budget_bytes = _default_tile_budget_bytes()
    budget = min(int(vmem_tile_budget_bytes), 48 << 20)

    per_b = (_padded_slab_bytes(C, R, L, x.dtype)
             + _padded_slab_bytes(1, R, L, s_dtype)
             + _padded_slab_bytes(C_out, R, L, x.dtype))
    tile_b = max(1, min(B, budget // (2 * per_b)))
    # Keep the grid at least ~4 steps (or B if smaller) so the pipeline overlaps
    # in-DMA / compute / out-DMA instead of serializing with grid=(1,).
    min_steps = min(B, 4)
    tile_b = min(tile_b, max(1, pl.cdiv(B, min_steps)))
    grid = (pl.cdiv(B, tile_b),)        # ragged last block handled by Pallas

    needed = 2 * tile_b * per_b         # double-buffered input+output footprint
    vmem_limit = int(min(max(needed + (8 << 20), 32 << 20), 56 << 20))

    bytes_accessed = (x4.size * x4.dtype.itemsize
                      + s4.size * s4.dtype.itemsize
                      + B * C_out * HW * x.dtype.itemsize)
    cost = pl.CostEstimate(flops=4 * B * C * HW, transcendentals=0,
                           bytes_accessed=bytes_accessed)

    kernel = functools.partial(_mask2d_kernel, value=float(value), append=append)

    out = pl.pallas_call(
        kernel,
        out_shape=jax.ShapeDtypeStruct((B, C_out, R, L), x.dtype),
        grid_spec=pl.GridSpec(
            grid=grid,
            in_specs=[
                pl.BlockSpec((tile_b, C, R, L), lambda i: (i, 0, 0, 0)),
                pl.BlockSpec((tile_b, R, L), lambda i: (i, 0, 0)),
            ],
            out_specs=pl.BlockSpec((tile_b, C_out, R, L), lambda i: (i, 0, 0, 0)),
        ),
        compiler_params=pltpu.CompilerParams(
            dimension_semantics=("parallel",),      # independent batch tiles
            vmem_limit_bytes=vmem_limit,
        ),
        cost_estimate=cost,
    )(x4, s4)
    return out.reshape(B, C_out, H, W)


if __name__ == "__main__":
    key = jax.random.PRNGKey(0)
    kx, ks = jax.random.split(key)

    B, C, H, W = 2, 3, 16, 16
    x = jax.random.normal(kx, (B, C, H, W), dtype=jnp.float32)
    # 3-D mask exercises the unsqueeze path of the module.
    S = (jax.random.uniform(ks, (B, H, W)) > 0.5).astype(jnp.float32)
    value = 0.5

    out_append = mask_layer_2d(x, S, value=value, append=True)
    out_plain = mask_layer_2d(x, S, value=value, append=False)
    jax.block_until_ready((out_append, out_plain))

    # Pure-JAX reference of the PyTorch forward.
    def ref(x, S, value, append):
        S4 = S[:, None, :, :] if S.ndim == 3 else S
        y = x * S4 + value * (1.0 - S4)
        if append:
            y = jnp.concatenate([y, S4.astype(x.dtype)], axis=1)
        return y

    assert out_append.shape == (B, C + 1, H, W)
    assert out_plain.shape == (B, C, H, W)
    assert jnp.allclose(out_append, ref(x, S, value, True), rtol=1e-6, atol=1e-6)
    assert jnp.allclose(out_plain, ref(x, S, value, False), rtol=1e-6, atol=1e-6)

    print("KERNEL_OK")
</pallas_src>

<mosaic_0001>
module attributes {stable_mosaic.version = 11 : i64} {
  func.func @_mask2d_kernel(%arg0: i32, %arg1: memref<1x3x2x128xf32, #tpu.memory_space<vmem>>, %arg2: memref<1x2x128xf32, #tpu.memory_space<vmem>>, %arg3: memref<1x4x2x128xf32, #tpu.memory_space<vmem>>) attributes {dimension_semantics = [#tpu.dimension_semantics<parallel>], iteration_bounds = array<i64: 2>, scalar_prefetch = 0 : i64, scratch_operands = 0 : i64, tpu.core_type = #tpu.core_type<tc>, window_params = [{transform_indices = @transform_0, window_bounds = array<i64: 1, 3, 2, 128>}, {transform_indices = @transform_1, window_bounds = array<i64: 1, 2, 128>}, {transform_indices = @transform_2, window_bounds = array<i64: 1, 4, 2, 128>}]} {
    %c0 = arith.constant 0 : index
    %c0_0 = arith.constant 0 : index
    %c0_1 = arith.constant 0 : index
    %c0_2 = arith.constant 0 : index
    %0 = vector.load %arg1[%c0, %c0_0, %c0_1, %c0_2] : memref<1x3x2x128xf32, #tpu.memory_space<vmem>>, vector<1x3x2x128xf32>
    %c0_3 = arith.constant 0 : index
    %c0_4 = arith.constant 0 : index
    %c0_5 = arith.constant 0 : index
    %1 = vector.load %arg2[%c0_3, %c0_4, %c0_5] : memref<1x2x128xf32, #tpu.memory_space<vmem>>, vector<1x2x128xf32>
    %2 = vector.shape_cast %1 : vector<1x2x128xf32> to vector<1x1x2x128xf32>
    %3 = vector.broadcast %2 : vector<1x1x2x128xf32> to vector<1x3x2x128xf32>
    %4 = arith.mulf %0, %3 : vector<1x3x2x128xf32>
    %cst = arith.constant 1.000000e+00 : f32
    %5 = vector.broadcast %cst : f32 to vector<1x1x2x128xf32>
    %6 = arith.subf %5, %2 : vector<1x1x2x128xf32>
    %cst_6 = arith.constant 5.000000e-01 : f32
    %7 = vector.broadcast %cst_6 : f32 to vector<1x1x2x128xf32>
    %8 = arith.mulf %7, %6 : vector<1x1x2x128xf32>
    %9 = vector.broadcast %8 : vector<1x1x2x128xf32> to vector<1x3x2x128xf32>
    %10 = arith.addf %4, %9 : vector<1x3x2x128xf32>
    %11 = tpu.concatenate %10, %2 in 1 : vector<1x3x2x128xf32>, vector<1x1x2x128xf32> -> vector<1x4x2x128xf32>
    %c0_7 = arith.constant 0 : index
    %c0_8 = arith.constant 0 : index
    %c0_9 = arith.constant 0 : index
    %c0_10 = arith.constant 0 : index
    %12 = vector.load %arg3[%c0_7, %c0_8, %c0_9, %c0_10] : memref<1x4x2x128xf32, #tpu.memory_space<vmem>>, vector<1x4x2x128xf32>
    tpu.vector_store %arg3[%c0_7, %c0_8, %c0_9, %c0_10], %11 {strides = array<i32>} : memref<1x4x2x128xf32, #tpu.memory_space<vmem>>, vector<1x4x2x128xf32>,
    return
  }
  func.func @transform_0(%arg0: i32) -> (i32, i32, i32, i32) {
    %c0_i32 = arith.constant 0 : i32
    %c0_i32_0 = arith.constant 0 : i32
    %c0_i32_1 = arith.constant 0 : i32
    %c0_i32_2 = arith.constant 0 : i32
    return %arg0, %c0_i32, %c0_i32_0, %c0_i32_1 : i32, i32, i32, i32
  }
  func.func @transform_1(%arg0: i32) -> (i32, i32, i32) {
    %c0_i32 = arith.constant 0 : i32
    %c0_i32_0 = arith.constant 0 : i32
    %c0_i32_1 = arith.constant 0 : i32
    return %arg0, %c0_i32, %c0_i32_0 : i32, i32, i32
  }
  func.func @transform_2(%arg0: i32) -> (i32, i32, i32, i32) {
    %c0_i32 = arith.constant 0 : i32
    %c0_i32_0 = arith.constant 0 : i32
    %c0_i32_1 = arith.constant 0 : i32
    %c0_i32_2 = arith.constant 0 : i32
    return %arg0, %c0_i32, %c0_i32_0, %c0_i32_1 : i32, i32, i32, i32
  }
}

</mosaic_0001>

<llo_original>
// kernel: tpu_custom_call.1
$region0: #{tpu_custom_call.1}
  #allocation0 [shape = 'u32[]', space=smem, size = 0x4, offset = 0x4, fixed_abs, tag = 'smem constant byte address 0x4 - core index']
  #allocation1 [shape = 'u32[144,128]{1,0:T(1,128)}', space=vmem, size = 0x12000, scoped, tag = 'internal scratch']
  %s0 = inlined_call_operand.hbm [shape: f32[2,3,2,128], index: 0, kind: input, shape index: {}]
  %s1 = inlined_call_operand.hbm [shape: f32[2,2,128], index: 1, kind: input, shape index: {}]
  %s2 = inlined_call_operand.hbm [shape: f32[2,4,2,128], index: 2, kind: output, shape index: {}]
  %s3 = sld [smem:[#allocation0]]
  $region49: #{tpu_custom_call.1} parent=0
    _
  %s5 = ssub.s32 1, %s3
  %s6 = scalar_select 0, %s5, %s3
  $region1: #{tpu_custom_call.1} parent=0
    #allocation2 [shape = 'u8[6144]{0}', space=vmem, size = 0x1800, scoped, tag = 'input window, operand 0']
    #allocation3 [shape = 's32[2]{0}', space=sflag, size = 0x8, scoped, tag = 'scoped memory for tpu_custom_call.1']
    #allocation4 [shape = 's32[2]{0}', space=sflag, size = 0x8, scoped, tag = 'scoped memory for tpu_custom_call.1']
    #allocation5 [shape = 'u8[2048]{0}', space=vmem, size = 0x800, scoped, tag = 'input window, operand 1']
    #allocation6 [shape = 's32[2]{0}', space=sflag, size = 0x8, scoped, tag = 'scoped memory for tpu_custom_call.1']
    #allocation7 [shape = 'u8[8192]{0}', space=vmem, size = 0x2000, scoped, tag = 'output window, operand 0']
    %7 = vsyncpa [#allocation3], 0
    %s8 = scalar_lea.sflag [#allocation3], 1
    %9 = vsyncpa %s8, 0
    %10 = vsyncpa [#allocation6], 0
    %s11 = scalar_lea.sflag [#allocation6], 1
    %12 = vsyncpa %s11, 0
    %13 = vsyncpa [#allocation4], 0
    %s14 = scalar_lea.sflag [#allocation4], 1
    %15 = vsyncpa %s14, 0
    loop: start=0, step=1, limit=4
    $region2: #{tpu_custom_call.1} parent=1 // loop_pre_header
      _
    $region3: #{tpu_custom_call.1} parent=1 // loop_header
      %s17 = sphi 0, %s21
      %p18 = scmp.ge.s32.totalorder %s17, 4
      %s27 = sphi 0, %s29
      %s30 = sphi 0, %s27
      %s31 = sphi 0, %s30
      %s47 = sphi 0, %s31
      %s53 = sphi 0, %s55
      %s56 = sphi 0, %s53
      %s57 = sphi 0, %s56
      %s73 = sphi 0, %s57
      %s79 = sphi 0, %s81
      %s82 = sphi 0, %s79
      %s83 = sphi 0, %s82
      %s99 = sphi 0, %s83
    $region4: #{tpu_custom_call.1} parent=1 // loop_header_branch
      %20 = sbr.rel (%p18) target = $region8
    $region5: #{tpu_custom_call.1} parent=1 // loop_body
      %s22 = ssub.s32 %s17, 1
      %s23 = ssub.s32 %s17, 2
      %s24 = sadd.s32 %s17, 1
      %s25 = ssub.s32 %s17, %s24
      %p26 = scmp.eq.s32.totalorder %s25, 0
      %s28 = sadd.s32 %s27, 1
      %s29 = scalar_select %p26, %s27, %s28
      %p32 = pneg %p26
      %p33 = scmp.eq.s32.totalorder %s17, 1
      %p34 = por %p32, %p33
      %p35 = scmp.ne.s32.totalorder %s27, %s30
      %p36 = scmp.eq.s32.totalorder %s17, 0
      %p37 = por %p35, %p36
      %p38 = scmp.ne.s32.totalorder %s27, %s30
      %p39 = scmp.eq.s32.totalorder %s22, 1
      %p40 = por %p38, %p39
      %p41 = scmp.ne.s32.totalorder %s30, %s31
      %p42 = scmp.eq.s32.totalorder %s22, 0
      %p43 = por %p41, %p42
      %p44 = scmp.ne.s32.totalorder %s30, %s31
      %p45 = scmp.eq.s32.totalorder %s23, 1
      %p46 = por %p44, %p45
      %p48 = scmp.ne.s32.totalorder %s31, %s47
      %p49 = scmp.eq.s32.totalorder %s23, 0
      %p50 = por %p48, %p49
      %s51 = ssub.s32 %s17, %s24
      %p52 = scmp.eq.s32.totalorder %s51, 0
      %s54 = sadd.s32 %s53, 1
      %s55 = scalar_select %p52, %s53, %s54
      %p58 = pneg %p52
      %p59 = scmp.eq.s32.totalorder %s17, 1
      %p60 = por %p58, %p59
      %p61 = scmp.ne.s32.totalorder %s53, %s56
      %p62 = scmp.eq.s32.totalorder %s17, 0
      %p63 = por %p61, %p62
      %p64 = scmp.ne.s32.totalorder %s53, %s56
      %p65 = scmp.eq.s32.totalorder %s22, 1
      %p66 = por %p64, %p65
      %p67 = scmp.ne.s32.totalorder %s56, %s57
      %p68 = scmp.eq.s32.totalorder %s22, 0
      %p69 = por %p67, %p68
      %p70 = scmp.ne.s32.totalorder %s56, %s57
      %p71 = scmp.eq.s32.totalorder %s23, 1
      %p72 = por %p70, %p71
      %p74 = scmp.ne.s32.totalorder %s57, %s73
      %p75 = scmp.eq.s32.totalorder %s23, 0
      %p76 = por %p74, %p75
      %s77 = ssub.s32 %s17, %s24
      %p78 = scmp.eq.s32.totalorder %s77, 0
      %s80 = sadd.s32 %s79, 1
      %s81 = scalar_select %p78, %s79, %s80
      %p84 = pneg %p78
      %p85 = scmp.eq.s32.totalorder %s17, 1
      %p86 = por %p84, %p85
      %p87 = scmp.ne.s32.totalorder %s79, %s82
      %p88 = scmp.eq.s32.totalorder %s17, 0
      %p89 = por %p87, %p88
      %p90 = scmp.ne.s32.totalorder %s79, %s82
      %p91 = scmp.eq.s32.totalorder %s22, 1
      %p92 = por %p90, %p91
      %p93 = scmp.ne.s32.totalorder %s82, %s83
      %p94 = scmp.eq.s32.totalorder %s22, 0
      %p95 = por %p93, %p94
      %p96 = scmp.ne.s32.totalorder %s82, %s83
      %p97 = scmp.eq.s32.totalorder %s23, 1
      %p98 = por %p96, %p97
      %p100 = scmp.ne.s32.totalorder %s83, %s99
      %p101 = scmp.eq.s32.totalorder %s23, 0
      %p102 = por %p100, %p101
      %p103 = scmp.le.s32.totalorder 1, %s17
      %p104 = scmp.lt.s32.totalorder %s17, 3
      %p105 = pnand %p103, %p104
      %p106 = pneg %p105
      // Predicated region
      $region9: #{tpu_custom_call.1} parent=5 // pred_check
        _
      $region10: #{tpu_custom_call.1} parent=5 // pred_check_branch
        %108 = sbr.rel (%p105) target = $region12
      $region11: #{tpu_custom_call.1} parent=5 // pred_region
        %s109 = ssub.s32 %s17, 1
      $region12: #{tpu_custom_call.1} parent=5 // pred_fallthru
        _
      %p110 = scmp.lt.s32.totalorder %s17, 2
      // Predicated region
      $region13: #{tpu_custom_call.1} parent=5 // pred_check
        %p111 = pneg %p110
      $region14: #{tpu_custom_call.1} parent=5 // pred_check_branch
        %113 = sbr.rel (%p111) target = $region16
      $region15: #{tpu_custom_call.1} parent=5 // pred_region
        // Predicated region
        $region17: #{tpu_custom_call.1} parent=15 // pred_check
          %p114 = pneg %p37
        $region18: #{tpu_custom_call.1} parent=15 // pred_check_branch
          %116 = sbr.rel (%p114) target = $region20
        $region19: #{tpu_custom_call.1} parent=15 // pred_region
          %s117 = sand.u32 %s27, 1
          %s118 = scalar_lea.sflag [#allocation3], %s117
          %s119 = sand.u32 %s27, 1
          %s120 = smul.addr %s119, 6
          %s121 = scalar_lea.vmem [#allocation2], %s120
          %s123 = ssub.s32 96, 96
          %124 = vsyncadd %s118, %s123
          %s125 = smul.addr %s17, 3
          %s126 = smul.addr %s125, 32
          %s127 = scalar_lea.hbm %s0, %s126
          %s128 = sshll.u32 %s121, 4
          %s129 = int_to_ptr.vmem [resolvable:$true] %s128
          %134 = dma.hbm_to_vmem [thread:$0]  %s127, 96, %s129, %s118, 32, 32, 2
        $region20: #{tpu_custom_call.1} parent=15 // pred_fallthru
          _
        // Predicated region
        $region21: #{tpu_custom_call.1} parent=15 // pred_check
          %p135 = pneg %p63
        $region22: #{tpu_custom_call.1} parent=15 // pred_check_branch
          %137 = sbr.rel (%p135) target = $region24
        $region23: #{tpu_custom_call.1} parent=15 // pred_region
          %s138 = sand.u32 %s53, 1
          %s139 = scalar_lea.sflag [#allocation6], %s138
          %s140 = sand.u32 %s53, 1
          %s141 = smul.addr %s140, 2
          %s142 = scalar_lea.vmem [#allocation5], %s141
          %s144 = ssub.s32 32, 32
          %145 = vsyncadd %s139, %s144
          %s146 = smul.addr %s17, 32
          %s147 = scalar_lea.hbm %s1, %s146
          %s149 = sshll.u32 %s142, 4
          %s150 = int_to_ptr.vmem [resolvable:$true] %s149
          %152 = dma.hbm_to_vmem [thread:$0]  %s147, 32, %s150, %s139
        $region24: #{tpu_custom_call.1} parent=15 // pred_fallthru
          _
      $region16: #{tpu_custom_call.1} parent=5 // pred_fallthru
        _
      %p153 = scmp.le.s32.totalorder 1, %s17
      %p154 = scmp.lt.s32.totalorder %s17, 3
      %p155 = pnand %p153, %p154
      %p156 = pneg %p155
      // Predicated region
      $region25: #{tpu_custom_call.1} parent=5 // pred_check
        _
      $region26: #{tpu_custom_call.1} parent=5 // pred_check_branch
        %158 = sbr.rel (%p155) target = $region28
      $region27: #{tpu_custom_call.1} parent=5 // pred_region
        %s159 = ssub.s32 %s17, 1
        %s160 = sand.u32 %s30, 1
        %s161 = scalar_lea.sflag [#allocation3], %s160
        %s162 = sand.u32 %s30, 1
        %s163 = smul.addr %s162, 6
        %s164 = scalar_lea.vmem [#allocation2], %s163
        // Predicated region
        $region29: #{tpu_custom_call.1} parent=27 // pred_check
          %p165 = pneg %p43
        $region30: #{tpu_custom_call.1} parent=27 // pred_check_branch
          %167 = sbr.rel (%p165) target = $region32
        $region31: #{tpu_custom_call.1} parent=27 // pred_region
          %168 = dma.done %s161, 96
        $region32: #{tpu_custom_call.1} parent=27 // pred_fallthru
          _
        %s169 = sand.u32 %s56, 1
        %s170 = scalar_lea.sflag [#allocation6], %s169
        %s171 = sand.u32 %s56, 1
        %s172 = smul.addr %s171, 2
        %s173 = scalar_lea.vmem [#allocation5], %s172
        // Predicated region
        $region33: #{tpu_custom_call.1} parent=27 // pred_check
          %p174 = pneg %p69
        $region34: #{tpu_custom_call.1} parent=27 // pred_check_branch
          %176 = sbr.rel (%p174) target = $region36
        $region35: #{tpu_custom_call.1} parent=27 // pred_region
          %177 = dma.done %s170, 32
        $region36: #{tpu_custom_call.1} parent=27 // pred_fallthru
          _
        %s178 = sand.u32 %s30, 1
        %s179 = scalar_lea.sflag [#allocation3], %s178
        %s180 = sand.u32 %s30, 1
        %s181 = smul.addr %s180, 6
        %s182 = scalar_lea.vmem [#allocation2], %s181
        %p183 = pneg %p43
        %p184 = pneg %p40
        %s185 = sand.u32 %s56, 1
        %s186 = scalar_lea.sflag [#allocation6], %s185
        %s187 = sand.u32 %s56, 1
        %s188 = smul.addr %s187, 2
        %s189 = scalar_lea.vmem [#allocation5], %s188
        %p190 = pneg %p69
        %p191 = pneg %p66
        %p192 = pneg %p95
        %p193 = pneg %p92
        %s194 = sand.u32 %s82, 1
        %s195 = scalar_lea.sflag [#allocation4], %s194
        %s196 = sand.u32 %s82, 1
        %s197 = smul.addr %s196, 8
        %s198 = scalar_lea.vmem [#allocation7], %s197
        %v199 = vld [vmem:[%s164] sm:$0x3]
        %v200 = vld [vmem:[%s164 + $0x2] sm:$0x3]
        %v201 = vld [vmem:[%s164 + $0x4] sm:$0x3]
        %v202 = vld [vmem:[%s173] sm:$0x3]
        %v203 = vmul.f32 %v199, %v202
        %v204 = vmul.f32 %v200, %v202
        %v205 = vmul.f32 %v201, %v202
        %v206 = vsub.f32 1.0, %v202
        %v207 = vmul.f32 %v206, 0.5
        %v208 = vadd.f32 %v203, %v207
        %v209 = vadd.f32 %v204, %v207
        %v210 = vadd.f32 %v205, %v207
        %211 = vst [vmem:[%s198] sm:$0x3] %v208
        %212 = vst [vmem:[%s198 + $0x2] sm:$0x3] %v209
        %213 = vst [vmem:[%s198 + $0x4] sm:$0x3] %v210
        %214 = vst [vmem:[%s198 + $0x6] sm:$0x3] %v202
        %s215 = sand.u32 %s82, 1
        %s216 = scalar_lea.sflag [#allocation4], %s215
        %s217 = sand.u32 %s82, 1
        %s218 = smul.addr %s217, 8
        %s219 = scalar_lea.vmem [#allocation7], %s218
        // Predicated region
        $region37: #{tpu_custom_call.1} parent=27 // pred_check
          %p220 = pneg %p92
        $region38: #{tpu_custom_call.1} parent=27 // pred_check_branch
          %222 = sbr.rel (%p220) target = $region40
        $region39: #{tpu_custom_call.1} parent=27 // pred_region
          %s224 = ssub.s32 128, 128
          %225 = vsyncadd %s216, %s224
          %s226 = smul.addr %s22, 4
          %s227 = smul.addr %s226, 32
          %s228 = scalar_lea.hbm %s2, %s227
          %s229 = sshll.u32 %s219, 4
          %s230 = int_to_ptr.vmem [resolvable:$true] %s229
          %235 = dma.vmem_to_hbm [thread:$0]  %s230, 128, %s228, %s216, 32, 32, 2
        $region40: #{tpu_custom_call.1} parent=27 // pred_fallthru
          _
      $region28: #{tpu_custom_call.1} parent=5 // pred_fallthru
        _
      %p236 = scmp.le.s32.totalorder 2, %s17
      // Predicated region
      $region41: #{tpu_custom_call.1} parent=5 // pred_check
        %p237 = pneg %p236
      $region42: #{tpu_custom_call.1} parent=5 // pred_check_branch
        %239 = sbr.rel (%p237) target = $region44
      $region43: #{tpu_custom_call.1} parent=5 // pred_region
        %s240 = ssub.s32 %s17, 2
        // Predicated region
        $region45: #{tpu_custom_call.1} parent=43 // pred_check
          %p241 = pneg %p98
        $region46: #{tpu_custom_call.1} parent=43 // pred_check_branch
          %243 = sbr.rel (%p241) target = $region48
        $region47: #{tpu_custom_call.1} parent=43 // pred_region
          %s244 = sand.u32 %s83, 1
          %s245 = scalar_lea.sflag [#allocation4], %s244
          %s246 = sand.u32 %s83, 1
          %s247 = smul.addr %s246, 8
          %s248 = scalar_lea.vmem [#allocation7], %s247
          %249 = dma.done %s245, 128
        $region48: #{tpu_custom_call.1} parent=43 // pred_fallthru
          _
      $region44: #{tpu_custom_call.1} parent=5 // pred_fallthru
        _
    $region6: #{tpu_custom_call.1} parent=1 // loop_footer
      %s21 = sadd.s32 1, %s17
    $region7: #{tpu_custom_call.1} parent=1 // loop_footer_branch
      %16 = sbr.rel target = $region3
    $region8: #{tpu_custom_call.1} parent=1 // loop_exit
      _
    %250 = vsyncpa [#allocation3], 1
    %s251 = scalar_lea.sflag [#allocation3], 1
    %252 = vsyncpa %s251, 1
    %253 = vsyncpa [#allocation6], 1
    %s254 = scalar_lea.sflag [#allocation6], 1
    %255 = vsyncpa %s254, 1
    %256 = vsyncpa [#allocation4], 1
    %s257 = scalar_lea.sflag [#allocation4], 1
    %258 = vsyncpa %s257, 1

</llo_original>
